<compile_context>
chip_gen: v7x
topology: tpu7x:2x2x1
jax: 0.10.0
libtpu: 0.0.40
codegen_flags: <defaults>
</compile_context>

<pallas_src>
import numpy as np
import jax
import jax.numpy as jnp
from jax.experimental import pallas as pl
from jax.experimental.pallas import tpu as pltpu


def _adaptive_avg_matrix(in_size: int, out_size: int) -> np.ndarray:
    """Row-stochastic (out_size, in_size) matrix M s.t. M @ v == adaptive_avg_pool1d(v).

    Window boundaries match PyTorch: start = floor(i*in/out), end = ceil((i+1)*in/out).
    """
    m = np.zeros((out_size, in_size), dtype=np.float32)
    for i in range(out_size):
        start = (i * in_size) // out_size
        end = -((-(i + 1) * in_size) // out_size)  # ceil((i+1)*in/out)
        m[i, start:end] = 1.0 / (end - start)
    return m


def _choose_tile_c(c: int, hw: int, itemsize: int,
                   budget_bytes: int = 16 * 1024 * 1024) -> int:
    """Channel-tile size: double-buffered (tile_c, H*W) input block stays under budget."""
    per_channel = hw * itemsize
    cap = int(max(1, min(budget_bytes // (2 * per_channel), 256)))
    if c <= cap:
        return c
    # Prefer a sublane-aligned (multiple of 8) tile that divides C exactly.
    for t in range(cap - cap % 8, 0, -8):
        if c % t == 0:
            return t
    # Fall back: multiple of 8; Pallas pads the last partial block (OOB writes masked).
    return max(8, cap - cap % 8)


def _pool_matmul_kernel(x_ref, pt_ref, o_ref):
    """x_ref: (TILE_C, H*W); pt_ref: (H*W, OH*OW); o_ref: (TILE_C, OH*OW).

    One canonical MXU matmul (contraction K = H*W on LHS lanes / RHS sublanes),
    f32 accumulation via preferred_element_type.
    """
    x = x_ref[...]
    if x.dtype != jnp.float32:           # trace-time branch; no-op for f32 inputs
        x = x.astype(jnp.float32)
    pooled = jnp.dot(x, pt_ref[...], preferred_element_type=jnp.float32)
    o_ref[...] = pooled.astype(o_ref.dtype)


def data_processor_forward(x: jax.Array, out_hw=(7, 7)) -> jax.Array:
    """x: (1, C, H, W) NCHW. Returns (oh*ow, C), matching the PyTorch module."""
    n, c, h, w = x.shape
    # TODO(synk): batched (N > 1) inputs are unsupported -- the module's
    # squeeze()/permute(1,2,0)/view(-1, C) semantics only make sense for N == 1.
    assert n == 1, "DataProcessor.forward semantics require a squeezable batch dim"
    oh, ow = out_hw
    npix = oh * ow
    hw = h * w
    itemsize = jnp.dtype(x.dtype).itemsize

    # (H*W, 49) pooling matrix = kron(Wh, Ww)^T, built once on host (tiny for typical
    # feature maps) and kept resident in VMEM across the whole grid.
    p_mat = np.kron(_adaptive_avg_matrix(h, oh), _adaptive_avg_matrix(w, ow))  # (49, H*W)
    pt = jnp.asarray(p_mat.T)                                                  # (H*W, 49)

    # Free 2-D view of the NCHW activation: (1, C, H, W) -> (C, H*W). Lane-dense DMA.
    x2 = x.reshape(c, hw)

    tile_c = _choose_tile_c(c, hw, itemsize)
    grid = (pl.cdiv(c, tile_c),)

    # VMEM need (double-buffered input/output blocks + pooling matrix) with headroom,
    # clamped to the smallest per-core VMEM (v7x: 64 MiB).
    # TODO(synk): for extremely large spatial inputs (H*W >~ 1e5) the pooling matrix no
    # longer fits VMEM; that would need an additional reduction-tiled ("arbitrary") axis.
    need = (2 * tile_c * hw * itemsize        # input block, double-buffered
            + 2 * hw * npix * 4               # pooling matrix (worst case double-buffered)
            + 2 * tile_c * npix * itemsize    # output block, double-buffered
            + tile_c * npix * 4)              # f32 matmul result before cast
    vmem_limit = int(min(64 * 1024 * 1024, max(32 * 1024 * 1024, need + need // 2)))

    flops = 2 * c * hw * npix
    bytes_accessed = c * hw * itemsize + c * npix * itemsize + hw * npix * 4

    pooled = pl.pallas_call(
        _pool_matmul_kernel,
        out_shape=jax.ShapeDtypeStruct((c, npix), x.dtype),
        grid=grid,
        in_specs=[
            pl.BlockSpec((tile_c, hw), lambda i: (i, 0)),   # channel tile of activation
            pl.BlockSpec((hw, npix), lambda i: (0, 0)),     # pooling matrix, fetched once
        ],
        out_specs=pl.BlockSpec((tile_c, npix), lambda i: (i, 0)),
        compiler_params=pltpu.CompilerParams(
            dimension_semantics=("parallel",),              # channel tiles split across TCs
            vmem_limit_bytes=vmem_limit,
        ),
        cost_estimate=pl.CostEstimate(
            flops=flops, transcendentals=0, bytes_accessed=bytes_accessed),
    )(x2, pt)                                               # -> (C, 49)

    # Tiny epilogue on the (C, 49) result only: squeeze -> permute(1,2,0) -> view(-1, C).
    return pooled.T                                         # (49, C)


def _reference_np(x: np.ndarray, out_hw=(7, 7)) -> np.ndarray:
    """float64 NumPy ground truth mirroring the PyTorch module."""
    n, c, h, w = x.shape
    oh, ow = out_hw
    wh = _adaptive_avg_matrix(h, oh).astype(np.float64)
    ww = _adaptive_avg_matrix(w, ow).astype(np.float64)
    pooled = np.einsum("oh,pw,chw->opc", wh, ww, x[0].astype(np.float64))  # (7, 7, C)
    return pooled.reshape(oh * ow, c)


if __name__ == "__main__":
    key = jax.random.PRNGKey(0)
    # Batch must be 1 (the module squeezes it); 14x14 is the canonical feature-map size
    # ahead of a 7x7 adaptive pool.  Inputs are quantized to multiples of 1/8 so every
    # window average is exactly representable -> the check is independent of the MXU's
    # f32 matmul pass count.
    x = jax.random.normal(key, (1, 8, 14, 14), dtype=jnp.float32)
    x = jnp.round(x * 8.0) / 8.0

    out = jax.block_until_ready(data_processor_forward(x))
    assert out.shape == (49, 8), out.shape

    ref = _reference_np(np.asarray(x))
    np.testing.assert_allclose(np.asarray(out), ref, rtol=1e-6, atol=1e-6)
    print("KERNEL_OK")
</pallas_src>

<mosaic_0001>
module attributes {stable_mosaic.version = 11 : i64} {
  func.func @_pool_matmul_kernel(%arg0: i32, %arg1: memref<8x196xf32, #tpu.memory_space<vmem>>, %arg2: memref<196x49xf32, #tpu.memory_space<vmem>>, %arg3: memref<8x49xf32, #tpu.memory_space<vmem>>) attributes {dimension_semantics = [#tpu.dimension_semantics<parallel>], iteration_bounds = array<i64: 1>, scalar_prefetch = 0 : i64, scratch_operands = 0 : i64, tpu.core_type = #tpu.core_type<tc>, window_params = [{transform_indices = @transform_0, window_bounds = array<i64: 8, 196>}, {pipeline_mode = #tpu.pipeline_mode<synchronous>, transform_indices = @transform_1, window_bounds = array<i64: 196, 49>}, {transform_indices = @transform_2, window_bounds = array<i64: 8, 49>}]} {
    %c0 = arith.constant 0 : index
    %c0_0 = arith.constant 0 : index
    %0 = vector.load %arg1[%c0, %c0_0] : memref<8x196xf32, #tpu.memory_space<vmem>>, vector<8x196xf32>
    %c0_1 = arith.constant 0 : index
    %c0_2 = arith.constant 0 : index
    %1 = vector.load %arg2[%c0_1, %c0_2] : memref<196x49xf32, #tpu.memory_space<vmem>>, vector<196x49xf32>
    %cst = arith.constant dense<0.000000e+00> : vector<8x49xf32>
    %2 = tpu.matmul %0, %1, %cst {dimension_numbers = #tpu.dot_dimension_numbers<[1], [0], [0], [1], [0, 0, 1, 1], [], []>} : vector<8x196xf32>, vector<196x49xf32>, vector<8x49xf32> -> vector<8x49xf32>
    %c0_3 = arith.constant 0 : index
    %c0_4 = arith.constant 0 : index
    %3 = vector.load %arg3[%c0_3, %c0_4] : memref<8x49xf32, #tpu.memory_space<vmem>>, vector<8x49xf32>
    tpu.vector_store %arg3[%c0_3, %c0_4], %2 {strides = array<i32>} : memref<8x49xf32, #tpu.memory_space<vmem>>, vector<8x49xf32>,
    return
  }
  func.func @transform_0(%arg0: i32) -> (i32, i32) {
    %c0_i32 = arith.constant 0 : i32
    %c0_i32_0 = arith.constant 0 : i32
    return %arg0, %c0_i32 : i32, i32
  }
  func.func @transform_1(%arg0: i32) -> (i32, i32) {
    %c0_i32 = arith.constant 0 : i32
    %c0_i32_0 = arith.constant 0 : i32
    %c0_i32_1 = arith.constant 0 : i32
    return %c0_i32, %c0_i32_0 : i32, i32
  }
  func.func @transform_2(%arg0: i32) -> (i32, i32) {
    %c0_i32 = arith.constant 0 : i32
    %c0_i32_0 = arith.constant 0 : i32
    return %arg0, %c0_i32 : i32, i32
  }
}

</mosaic_0001>

<llo_original>
// kernel: tpu_custom_call.1
$region0: #{tpu_custom_call.1}
  #allocation0 [shape = 'u32[]', space=smem, size = 0x4, offset = 0x4, fixed_abs, tag = 'smem constant byte address 0x4 - core index']
  #allocation1 [shape = 'u32[144,128]{1,0:T(1,128)}', space=vmem, size = 0x12000, scoped, tag = 'internal scratch']
  %s0 = inlined_call_operand.vmem [shape: f32[8,196], index: 0, kind: input, shape index: {}]
  %s1 = inlined_call_operand.vmem [shape: f32[196,49], index: 1, kind: input, shape index: {}]
  %s2 = inlined_call_operand.hbm [shape: f32[8,49], index: 2, kind: output, shape index: {}]
  %s3 = sld [smem:[#allocation0]]
  $region18: #{tpu_custom_call.1} parent=0
    _
  %s5 = ssub.s32 1, %s3
  %s6 = scalar_select 0, %s5, %s3
  $region1: #{tpu_custom_call.1} parent=0
    #allocation2 [shape = 'u8[4096]{0}', space=vmem, size = 0x1000, scoped, tag = 'output window, operand 0, single buffered']
    #allocation3 [shape = 's32[1]{0}', space=sflag, size = 0x4, scoped, tag = 'scoped memory for tpu_custom_call.1']
    %7 = vsyncpa [#allocation3], 0
    // Predicated region
    $region2: #{tpu_custom_call.1} parent=1 // pred_check
      _
    $region3: #{tpu_custom_call.1} parent=1 // pred_check_branch
      %9 = sbr.rel (0) target = $region5
    $region4: #{tpu_custom_call.1} parent=1 // pred_region
      _
    $region5: #{tpu_custom_call.1} parent=1 // pred_fallthru
      _
    // Predicated region
    $region6: #{tpu_custom_call.1} parent=1 // pred_check
      _
    $region7: #{tpu_custom_call.1} parent=1 // pred_check_branch
      %11 = sbr.rel (0) target = $region9
    $region8: #{tpu_custom_call.1} parent=1 // pred_region
      _
    $region9: #{tpu_custom_call.1} parent=1 // pred_fallthru
      _
    %v12 = vld [vmem:[%s0] sm:$0xff]
    %v13 = vld [vmem:[%s0 + $0x8] sm:$0xff]
    %v14 = vld [vmem:[%s1] sm:$0xff]
    %v15 = vld [vmem:[%s1 + $0x8] sm:$0xff]
    %v16 = vld [vmem:[%s1 + $0x10] sm:$0xff]
    %v17 = vld [vmem:[%s1 + $0x18] sm:$0xff]
    %v18 = vld [vmem:[%s1 + $0x20] sm:$0xff]
    %v19 = vld [vmem:[%s1 + $0x28] sm:$0xff]
    %v20 = vld [vmem:[%s1 + $0x30] sm:$0xff]
    %v21 = vld [vmem:[%s1 + $0x38] sm:$0xff]
    %v22 = vld [vmem:[%s1 + $0x40] sm:$0xff]
    %v23 = vld [vmem:[%s1 + $0x48] sm:$0xff]
    %v24 = vld [vmem:[%s1 + $0x50] sm:$0xff]
    %v25 = vld [vmem:[%s1 + $0x58] sm:$0xff]
    %v26 = vld [vmem:[%s1 + $0x60] sm:$0xff]
    %v27 = vld [vmem:[%s1 + $0x68] sm:$0xff]
    %v28 = vld [vmem:[%s1 + $0x70] sm:$0xff]
    %v29 = vld [vmem:[%s1 + $0x78] sm:$0xff]
    %v30 = vld [vmem:[%s1 + $0x80] sm:$0xff]
    %v31 = vld [vmem:[%s1 + $0x88] sm:$0xff]
    %v32 = vld [vmem:[%s1 + $0x90] sm:$0xff]
    %v33 = vld [vmem:[%s1 + $0x98] sm:$0xff]
    %v34 = vld [vmem:[%s1 + $0xa0] sm:$0xff]
    %v35 = vld [vmem:[%s1 + $0xa8] sm:$0xff]
    %v36 = vld [vmem:[%s1 + $0xb0] sm:$0xff]
    %v37 = vld [vmem:[%s1 + $0xb8] sm:$0xff]
    %v38 = vld [vmem:[%s1 + $0xc0] sm:$0xf]
    %vm39 = vcmask 556032
    %v41 = vsel %vm39, %v13, 0
    %vm43 = vcmask 1043456
    %v45 = vsel %vm43, %v38, 0
    %47 = vmatprep.subr.mxu0 0.0
    %48 = vmatpush1.msra.mxu0 %v14
    %49 = vmatprep.subr.mxu0 0.0
    %50 = vmatpush1.msra.mxu0 %v15
    %51 = vmatprep.subr.mxu0 0.0
    %52 = vmatpush1.msra.mxu0 %v16
    %53 = vmatprep.subr.mxu0 0.0
    %54 = vmatpush1.msra.mxu0 %v17
    %55 = vmatprep.subr.mxu0 0.0
    %56 = vmatpush1.msra.mxu0 %v18
    %57 = vmatprep.subr.mxu0 0.0
    %58 = vmatpush1.msra.mxu0 %v19
    %59 = vmatprep.subr.mxu0 0.0
    %60 = vmatpush1.msra.mxu0 %v20
    %61 = vmatprep.subr.mxu0 0.0
    %62 = vmatpush1.msra.mxu0 %v21
    %63 = vmatprep.subr.mxu0 0.0
    %64 = vmatpush1.msra.mxu0 %v22
    %65 = vmatprep.subr.mxu0 0.0
    %66 = vmatpush1.msra.mxu0 %v23
    %67 = vmatprep.subr.mxu0 0.0
    %68 = vmatpush1.msra.mxu0 %v24
    %69 = vmatprep.subr.mxu0 0.0
    %70 = vmatpush1.msra.mxu0 %v25
    %71 = vmatprep.subr.mxu0 0.0
    %72 = vmatpush1.msra.mxu0 %v26
    %73 = vmatprep.subr.mxu0 0.0
    %74 = vmatpush1.msra.mxu0 %v27
    %75 = vmatprep.subr.mxu0 0.0
    %76 = vmatpush1.msra.mxu0 %v28
    %77 = vmatprep.subr.mxu0 0.0
    %78 = vmatpush1.msra.mxu0 %v29
    %79 = vmatprep.subr.mxu0 0.0
    %80 = vmatpush1.msra.mxu0 %v30
    %81 = vmatprep.subr.mxu0 0.0
    %82 = vmatpush1.msra.mxu0 %v31
    %83 = vmatprep.subr.mxu0 0.0
    %84 = vmatpush1.msra.mxu0 %v32
    %85 = vmatprep.subr.mxu0 0.0
    %86 = vmatpush1.msra.mxu0 %v33
    %87 = vmatprep.subr.mxu0 0.0
    %88 = vmatpush1.msra.mxu0 %v34
    %89 = vmatprep.subr.mxu0 0.0
    %90 = vmatpush1.msra.mxu0 %v35
    %91 = vmatprep.subr.mxu0 0.0
    %92 = vmatpush1.msra.mxu0 %v36
    %93 = vmatprep.subr.mxu0 0.0
    %94 = vmatpush1.msra.mxu0 %v37
    %95 = vmatprep.subr.mxu0 0.0
    %96 = vmatpush1.msra.mxu0 %v45
    %97 = vmatprep.subr.mxu0 0.0
    %98 = vmatpush1.msra.mxu0 0.0
    %99 = vmatprep.subr.mxu0 0.0
    %100 = vmatpush1.msra.mxu0 0.0
    %101 = vmatprep.subr.mxu0 0.0
    %102 = vmatpush1.msra.mxu0 0.0
    %103 = vmatprep.subr.mxu0 0.0
    %104 = vmatpush1.msra.mxu0 0.0
    %105 = vmatprep.subr.mxu0 0.0
    %106 = vmatpush1.msra.mxu0 0.0
    %107 = vmatprep.subr.mxu0 0.0
    %108 = vmatpush1.msra.mxu0 0.0
    %109 = vmatprep.subr.mxu0 0.0
    %110 = vmatpush1.msra.mxu0 0.0
    %111 = vmatprep.mubr.f32.mxu0 %v41
    %112 = vmatmul.mubr.f32.gmra.mrb[0].mxu0 %v12
    %v113 = vpop.f32.mrb[0].mxu0
    %v114 = vadd.f32 0.0, %v113
    %v115 = vpop.f32.mrb[0].mxu0
    %116 = vdwg.mxu0
    %vm117 = vcmask 400384
    %118 = vst.msk [vmem:[#allocation2] sm:$0xff] %vm117, %v114
    // Predicated region
    $region10: #{tpu_custom_call.1} parent=1 // pred_check
      _
    $region11: #{tpu_custom_call.1} parent=1 // pred_check_branch
      %120 = sbr.rel (0) target = $region13
    $region12: #{tpu_custom_call.1} parent=1 // pred_region
      %s122 = ssub.s32 128, 128
      %123 = vsyncadd [#allocation3], %s122
      %s125 = sshll.u32 [#allocation2], 4
      %s126 = int_to_ptr.vmem [resolvable:$true] %s125
      %128 = dma.vmem_to_hbm [thread:$0]  %s126, 128, %s2, [#allocation3]
    $region13: #{tpu_custom_call.1} parent=1 // pred_fallthru
      _
    // Predicated region
    $region14: #{tpu_custom_call.1} parent=1 // pred_check
      _
    $region15: #{tpu_custom_call.1} parent=1 // pred_check_branch
      %130 = sbr.rel (0) target = $region17
    $region16: #{tpu_custom_call.1} parent=1 // pred_region
      %131 = dma.done [#allocation3], 128
    $region17: #{tpu_custom_call.1} parent=1 // pred_fallthru
      _
    %132 = vsyncpa [#allocation3], 1

</llo_original>
